<compile_context>
chip_gen: v7x
topology: tpu7x:2x2x1
jax: 0.10.0
libtpu: 0.0.40
codegen_flags: <defaults>
</compile_context>

<pallas_src>
import functools

import jax
import jax.numpy as jnp
from jax.experimental import pallas as pl
from jax.experimental.pallas import tpu as pltpu


def _round_up(n, m):
    return ((n + m - 1) // m) * m


def _cdiv(a, b):
    return (a + b - 1) // b


def _vmem_budget_bytes():
    """Chip-aware VMEM budget (v5e/v6e: 128 MiB physical, v7x: 64 MiB)."""
    cap = None
    try:
        cap = getattr(pltpu.get_tpu_info(), "vmem_capacity_bytes", None)
    except Exception:
        cap = None
    if not cap:
        cap = 64 * 1024 * 1024  # conservative fallback: assume v7x-sized VMEM
    return min(int(cap) * 3 // 4, 96 * 1024 * 1024)


def _vmem_estimate(blk, k, n, in_itemsize=4, w_itemsize=2):
    # Double-buffered x / out blocks + (still double-buffered) resident weight
    # and bias + headroom for f32 intermediates (logits, exp, reductions).
    return (2 * blk * k * in_itemsize
            + 2 * blk * n * 4
            + 2 * (k * n * w_itemsize + n * 4)
            + 4 * blk * n * 4)


def _categorical_kernel(x_ref, w_ref, b_ref, out_ref, *,
                        rows_per_slab_row, n_out):
    # Linear.  x is cast to bf16 in-kernel (VPU slack, no extra HBM pass);
    # MXU accumulates in f32.
    x = x_ref[...].astype(w_ref.dtype)
    logits = jnp.dot(x, w_ref[...], preferred_element_type=jnp.float32)
    logits = logits + b_ref[...]
    # Categorical(logits=...) normalization: logits - logsumexp(logits, -1).
    m = jnp.max(logits, axis=-1, keepdims=True)
    z = logits - m
    lse = jnp.log(jnp.sum(jnp.exp(z), axis=-1, keepdims=True))
    lp = z - lse
    if rows_per_slab_row == 1:
        out_ref[...] = lp.astype(out_ref.dtype)
    else:
        # Lane-dense packing: out_ref is a (blk // rpr, rpr * n_out == 128)
        # slab, so the output block is lane-dense (dense VMEM tile + dense
        # VMEM->HBM DMA) instead of a lane-sparse (blk, n_out < 128) tile.
        sr = out_ref.shape[0]
        for j in range(rows_per_slab_row):
            out_ref[:, j * n_out:(j + 1) * n_out] = (
                lp[j * sr:(j + 1) * sr, :].astype(out_ref.dtype))


def categorical_forward(x, w, b, *, block_b=8192):
    """Forward of the Categorical head.

    Returns normalized logits (logits - logsumexp(logits, -1)), i.e. the
    log-probs that parameterize torch.distributions.Categorical(logits=...).
    probs are recoverable as jnp.exp(result) (see `categorical_probs`).

    x: (B, num_inputs) f32; w: (num_inputs, num_outputs) (x @ w + b matches
    PyTorch's x @ W.T + b for W_torch of shape (num_outputs, num_inputs));
    b: (num_outputs,).
    """
    B, K = x.shape
    K2, N = w.shape
    assert K == K2 and b.shape == (N,)

    # Lane-dense output packing when the output is lane-sparse (N < 128).
    packed = (N < 128) and (128 % N == 0) and (N >= 8)
    rpr = (128 // N) if packed else 1          # rows packed per slab row
    granule = 8 * rpr                          # blk granularity

    # Only tiny batches (< one granule) get padded; large ragged batches are
    # handled with a ragged last tile (OOB rows computed on garbage, writes
    # discarded / sliced off) -> no full-array jnp.pad copy of x.
    if B < granule:
        Bp = granule
        x = jnp.pad(x, ((0, Bp - B), (0, 0)))
    else:
        Bp = B

    # Batch tile: large (per-grid-step overhead ~0.35 us), bounded by the
    # chip-aware VMEM budget, multiple of `granule`, and <= Bp.
    budget = _vmem_budget_bytes()
    blk = max(granule, (block_b // granule) * granule)
    blk = min(blk, (Bp // granule) * granule)
    while blk > granule and _vmem_estimate(blk, K, N) > budget:
        blk = max(granule, (blk // 2 // granule) * granule)
    if _vmem_estimate(blk, K, N) > budget:
        # TODO(synk): K/N tiling (tk/tn multiples of 256 on v6e/v7x, 128 on
        # v5e, f32 VMEM accumulator, K axis last and "arbitrary") for weights
        # that do not fit VMEM-resident.
        raise NotImplementedError(
            "weight-resident config exceeds the VMEM budget; "
            "K/N tiling not implemented")

    nb = _cdiv(Bp, blk)

    # Weight is tiny and reused every grid step -> pre-cast to bf16 in the
    # wrapper.  x stays f32 at the boundary (cast happens in-kernel).
    w_bf = w.astype(jnp.bfloat16)
    b2 = b.reshape(1, N).astype(jnp.float32)

    kernel = functools.partial(_categorical_kernel,
                               rows_per_slab_row=rpr, n_out=N)

    if packed:
        sr = blk // rpr
        out_shape = jax.ShapeDtypeStruct((nb * sr, rpr * N), jnp.float32)
        out_spec = pl.BlockSpec((sr, rpr * N), lambda i: (i, 0))
    else:
        out_shape = jax.ShapeDtypeStruct((Bp, N), jnp.float32)
        out_spec = pl.BlockSpec((blk, N), lambda i: (i, 0))

    # TODO(synk): pipeline_mode=pl.Buffered(1) on the grid-invariant weight /
    # bias specs would halve their VMEM footprint for large K*N.
    # TODO(synk): on v7x use pltpu.CORE_PARALLEL / pl.core_map to actually
    # shard the batch grid across both TensorCores.
    # TODO(synk): emit bf16 normalized logits if downstream sampling
    # tolerates it (cuts output HBM traffic in half).
    grid_spec = pltpu.PrefetchScalarGridSpec(
        num_scalar_prefetch=0,
        grid=(nb,),
        in_specs=[
            pl.BlockSpec((blk, K), lambda i: (i, 0)),
            pl.BlockSpec((K, N), lambda i: (0, 0)),
            pl.BlockSpec((1, N), lambda i: (0, 0)),
        ],
        out_specs=out_spec,
    )
    out = pl.pallas_call(
        kernel,
        out_shape=out_shape,
        grid_spec=grid_spec,
        compiler_params=pltpu.CompilerParams(
            dimension_semantics=("parallel",),
            vmem_limit_bytes=budget),
    )(x, w_bf, b2)

    if packed:
        sr = blk // rpr
        # Unscramble the lane-dense slab back to (B, N): layout plumbing in
        # the wrapper (one XLA transpose), not in-kernel compute.
        out = out.reshape(nb, sr, rpr, N).transpose(0, 2, 1, 3)
        out = out.reshape(nb * blk, N)
        return out[:B]
    return out[:B] if out.shape[0] != B else out


def categorical_probs(norm_logits):
    # probs of the distribution: exp of normalized logits == softmax(raw).
    return jnp.exp(norm_logits)


if __name__ == "__main__":
    # Small shapes consistent with the module: batch=8, num_inputs=32,
    # num_outputs=16.
    B, num_inputs, num_outputs = 8, 32, 16

    key = jax.random.PRNGKey(0)
    kx, kw = jax.random.split(key)

    # Deterministic parameter init matching the module's __init__:
    #   orthogonal_(weight, gain=0.01), constant_(bias, 0)
    w = jax.nn.initializers.orthogonal(scale=0.01)(
        kw, (num_inputs, num_outputs), jnp.float32)
    b = jnp.zeros((num_outputs,), jnp.float32)
    x = jax.random.normal(kx, (B, num_inputs), jnp.float32)

    logits = categorical_forward(x, w, b)
    probs = categorical_probs(logits)
    jax.block_until_ready((logits, probs))
    assert logits.shape == (B, num_outputs)

    # Reference with matching bf16 input cast + f32 accumulation.
    raw_bf = jnp.dot(x.astype(jnp.bfloat16), w.astype(jnp.bfloat16),
                     preferred_element_type=jnp.float32) + b
    ref_logits_bf = raw_bf - jax.scipy.special.logsumexp(
        raw_bf, axis=-1, keepdims=True)
    assert jnp.allclose(logits, ref_logits_bf, atol=1e-3, rtol=1e-3)

    # Full-f32 reference (bf16 cast adds a small, bounded error).
    raw = x @ w + b
    ref_logits = raw - jax.scipy.special.logsumexp(raw, axis=-1,
                                                   keepdims=True)
    ref_probs = jax.nn.softmax(raw, axis=-1)
    assert jnp.allclose(logits, ref_logits, atol=1e-2, rtol=1e-2)
    assert jnp.allclose(probs, ref_probs, atol=1e-2, rtol=1e-2)
    assert jnp.allclose(jnp.sum(probs, axis=-1), 1.0, atol=1e-4)

    # Exercise the large / ragged-batch path (multi-step grid, lane-dense
    # slab, ragged last tile, no x padding).
    Bb = 1000
    xb = jax.random.normal(jax.random.PRNGKey(1), (Bb, num_inputs),
                           jnp.float32)
    lb = categorical_forward(xb, w, b)
    jax.block_until_ready(lb)
    raw_b = jnp.dot(xb.astype(jnp.bfloat16), w.astype(jnp.bfloat16),
                    preferred_element_type=jnp.float32) + b
    ref_b = raw_b - jax.scipy.special.logsumexp(raw_b, axis=-1, keepdims=True)
    assert lb.shape == (Bb, num_outputs)
    assert jnp.allclose(lb, ref_b, atol=1e-3, rtol=1e-3)

    print("KERNEL_OK")
</pallas_src>

<mosaic_0001>
module attributes {stable_mosaic.version = 11 : i64} {
  func.func @_categorical_kernel(%arg0: i32, %arg1: memref<64x32xf32, #tpu.memory_space<vmem>>, %arg2: memref<32x16xbf16, #tpu.memory_space<vmem>>, %arg3: memref<1x16xf32, #tpu.memory_space<vmem>>, %arg4: memref<8x128xf32, #tpu.memory_space<vmem>>) attributes {dimension_semantics = [#tpu.dimension_semantics<parallel>], iteration_bounds = array<i64: 1>, scalar_prefetch = 0 : i64, scratch_operands = 0 : i64, tpu.core_type = #tpu.core_type<tc>, window_params = [{transform_indices = @transform_0, window_bounds = array<i64: 64, 32>}, {pipeline_mode = #tpu.pipeline_mode<synchronous>, transform_indices = @transform_1, window_bounds = array<i64: 32, 16>}, {pipeline_mode = #tpu.pipeline_mode<synchronous>, transform_indices = @transform_2, window_bounds = array<i64: 1, 16>}, {transform_indices = @transform_3, window_bounds = array<i64: 8, 128>}]} {
    %c0 = arith.constant 0 : index
    %c0_0 = arith.constant 0 : index
    %0 = vector.load %arg1[%c0, %c0_0] : memref<64x32xf32, #tpu.memory_space<vmem>>, vector<64x32xf32>
    %1 = arith.truncf %0 : vector<64x32xf32> to vector<64x32xbf16>
    %c0_1 = arith.constant 0 : index
    %c0_2 = arith.constant 0 : index
    %2 = vector.load %arg2[%c0_1, %c0_2] : memref<32x16xbf16, #tpu.memory_space<vmem>>, vector<32x16xbf16>
    %cst = arith.constant dense<0.000000e+00> : vector<64x16xf32>
    %3 = tpu.matmul %1, %2, %cst {dimension_numbers = #tpu.dot_dimension_numbers<[1], [0], [0], [1], [0, 0, 1, 1], [], []>} : vector<64x32xbf16>, vector<32x16xbf16>, vector<64x16xf32> -> vector<64x16xf32>
    %c0_3 = arith.constant 0 : index
    %c0_4 = arith.constant 0 : index
    %4 = vector.load %arg3[%c0_3, %c0_4] : memref<1x16xf32, #tpu.memory_space<vmem>>, vector<1x16xf32>
    %5 = vector.broadcast %4 : vector<1x16xf32> to vector<64x16xf32>
    %6 = arith.addf %3, %5 : vector<64x16xf32>
    %cst_5 = arith.constant dense<0xFF800000> : vector<64xf32>
    %7 = vector.multi_reduction <maximumf>, %6, %cst_5 [1] : vector<64x16xf32> to vector<64xf32>
    %8 = vector.shape_cast %7 : vector<64xf32> to vector<64x1xf32>
    %9 = vector.broadcast %8 : vector<64x1xf32> to vector<64x16xf32>
    %10 = arith.subf %6, %9 : vector<64x16xf32>
    %11 = math.exp %10 : vector<64x16xf32>
    %cst_6 = arith.constant dense<0.000000e+00> : vector<64xf32>
    %12 = vector.multi_reduction <add>, %11, %cst_6 [1] : vector<64x16xf32> to vector<64xf32>
    %13 = vector.shape_cast %12 : vector<64xf32> to vector<64x1xf32>
    %14 = math.log %13 : vector<64x1xf32>
    %15 = vector.broadcast %14 : vector<64x1xf32> to vector<64x16xf32>
    %16 = arith.subf %10, %15 : vector<64x16xf32>
    %17 = vector.extract_strided_slice %16 {offsets = [0, 0], sizes = [8, 16], strides = [1, 1]} : vector<64x16xf32> to vector<8x16xf32>
    %c0_7 = arith.constant 0 : index
    %c0_8 = arith.constant 0 : index
    %18 = vector.load %arg4[%c0_7, %c0_8] : memref<8x128xf32, #tpu.memory_space<vmem>>, vector<8x16xf32>
    tpu.vector_store %arg4[%c0_7, %c0_8], %17 {strides = array<i32>} : memref<8x128xf32, #tpu.memory_space<vmem>>, vector<8x16xf32>,
    %19 = vector.extract_strided_slice %16 {offsets = [8, 0], sizes = [8, 16], strides = [1, 1]} : vector<64x16xf32> to vector<8x16xf32>
    %c0_9 = arith.constant 0 : index
    %c16 = arith.constant 16 : index
    %20 = vector.load %arg4[%c0_9, %c16] : memref<8x128xf32, #tpu.memory_space<vmem>>, vector<8x16xf32>
    tpu.vector_store %arg4[%c0_9, %c16], %19 {strides = array<i32>} : memref<8x128xf32, #tpu.memory_space<vmem>>, vector<8x16xf32>,
    %21 = vector.extract_strided_slice %16 {offsets = [16, 0], sizes = [8, 16], strides = [1, 1]} : vector<64x16xf32> to vector<8x16xf32>
    %c0_10 = arith.constant 0 : index
    %c32 = arith.constant 32 : index
    %22 = vector.load %arg4[%c0_10, %c32] : memref<8x128xf32, #tpu.memory_space<vmem>>, vector<8x16xf32>
    tpu.vector_store %arg4[%c0_10, %c32], %21 {strides = array<i32>} : memref<8x128xf32, #tpu.memory_space<vmem>>, vector<8x16xf32>,
    %23 = vector.extract_strided_slice %16 {offsets = [24, 0], sizes = [8, 16], strides = [1, 1]} : vector<64x16xf32> to vector<8x16xf32>
    %c0_11 = arith.constant 0 : index
    %c48 = arith.constant 48 : index
    %24 = vector.load %arg4[%c0_11, %c48] : memref<8x128xf32, #tpu.memory_space<vmem>>, vector<8x16xf32>
    tpu.vector_store %arg4[%c0_11, %c48], %23 {strides = array<i32>} : memref<8x128xf32, #tpu.memory_space<vmem>>, vector<8x16xf32>,
    %25 = vector.extract_strided_slice %16 {offsets = [32, 0], sizes = [8, 16], strides = [1, 1]} : vector<64x16xf32> to vector<8x16xf32>
    %c0_12 = arith.constant 0 : index
    %c64 = arith.constant 64 : index
    %26 = vector.load %arg4[%c0_12, %c64] : memref<8x128xf32, #tpu.memory_space<vmem>>, vector<8x16xf32>
    tpu.vector_store %arg4[%c0_12, %c64], %25 {strides = array<i32>} : memref<8x128xf32, #tpu.memory_space<vmem>>, vector<8x16xf32>,
    %27 = vector.extract_strided_slice %16 {offsets = [40, 0], sizes = [8, 16], strides = [1, 1]} : vector<64x16xf32> to vector<8x16xf32>
    %c0_13 = arith.constant 0 : index
    %c80 = arith.constant 80 : index
    %28 = vector.load %arg4[%c0_13, %c80] : memref<8x128xf32, #tpu.memory_space<vmem>>, vector<8x16xf32>
    tpu.vector_store %arg4[%c0_13, %c80], %27 {strides = array<i32>} : memref<8x128xf32, #tpu.memory_space<vmem>>, vector<8x16xf32>,
    %29 = vector.extract_strided_slice %16 {offsets = [48, 0], sizes = [8, 16], strides = [1, 1]} : vector<64x16xf32> to vector<8x16xf32>
    %c0_14 = arith.constant 0 : index
    %c96 = arith.constant 96 : index
    %30 = vector.load %arg4[%c0_14, %c96] : memref<8x128xf32, #tpu.memory_space<vmem>>, vector<8x16xf32>
    tpu.vector_store %arg4[%c0_14, %c96], %29 {strides = array<i32>} : memref<8x128xf32, #tpu.memory_space<vmem>>, vector<8x16xf32>,
    %31 = vector.extract_strided_slice %16 {offsets = [56, 0], sizes = [8, 16], strides = [1, 1]} : vector<64x16xf32> to vector<8x16xf32>
    %c0_15 = arith.constant 0 : index
    %c112 = arith.constant 112 : index
    %32 = vector.load %arg4[%c0_15, %c112] : memref<8x128xf32, #tpu.memory_space<vmem>>, vector<8x16xf32>
    tpu.vector_store %arg4[%c0_15, %c112], %31 {strides = array<i32>} : memref<8x128xf32, #tpu.memory_space<vmem>>, vector<8x16xf32>,
    return
  }
  func.func @transform_0(%arg0: i32) -> (i32, i32) {
    %c0_i32 = arith.constant 0 : i32
    %c0_i32_0 = arith.constant 0 : i32
    return %arg0, %c0_i32 : i32, i32
  }
  func.func @transform_1(%arg0: i32) -> (i32, i32) {
    %c0_i32 = arith.constant 0 : i32
    %c0_i32_0 = arith.constant 0 : i32
    %c0_i32_1 = arith.constant 0 : i32
    return %c0_i32, %c0_i32_0 : i32, i32
  }
  func.func @transform_2(%arg0: i32) -> (i32, i32) {
    %c0_i32 = arith.constant 0 : i32
    %c0_i32_0 = arith.constant 0 : i32
    %c0_i32_1 = arith.constant 0 : i32
    return %c0_i32, %c0_i32_0 : i32, i32
  }
  func.func @transform_3(%arg0: i32) -> (i32, i32) {
    %c0_i32 = arith.constant 0 : i32
    %c0_i32_0 = arith.constant 0 : i32
    return %arg0, %c0_i32 : i32, i32
  }
}

</mosaic_0001>

<llo_original>
// kernel: tpu_custom_call.1
$region0: #{tpu_custom_call.1}
  #allocation0 [shape = 'u32[]', space=smem, size = 0x4, offset = 0x4, fixed_abs, tag = 'smem constant byte address 0x4 - core index']
  #allocation1 [shape = 'u32[144,128]{1,0:T(1,128)}', space=vmem, size = 0x12000, scoped, tag = 'internal scratch']
  %s0 = inlined_call_operand.vmem [shape: f32[64,32], index: 0, kind: input, shape index: {}]
  %s1 = inlined_call_operand.vmem [shape: bf16[32,16], index: 1, kind: input, shape index: {}]
  %s2 = inlined_call_operand.vmem [shape: f32[1,16], index: 2, kind: input, shape index: {}]
  %s3 = inlined_call_operand.hbm [shape: f32[8,128], index: 3, kind: output, shape index: {}]
  %s4 = sld [smem:[#allocation0]]
  $region22: #{tpu_custom_call.1} parent=0
    _
  %s6 = ssub.s32 1, %s4
  %s7 = scalar_select 0, %s6, %s4
  $region1: #{tpu_custom_call.1} parent=0
    #allocation2 [shape = 'u8[4096]{0}', space=vmem, size = 0x1000, scoped, tag = 'output window, operand 0, single buffered']
    #allocation3 [shape = 's32[1]{0}', space=sflag, size = 0x4, scoped, tag = 'scoped memory for tpu_custom_call.1']
    %8 = vsyncpa [#allocation3], 0
    // Predicated region
    $region2: #{tpu_custom_call.1} parent=1 // pred_check
      _
    $region3: #{tpu_custom_call.1} parent=1 // pred_check_branch
      %10 = sbr.rel (0) target = $region5
    $region4: #{tpu_custom_call.1} parent=1 // pred_region
      _
    $region5: #{tpu_custom_call.1} parent=1 // pred_fallthru
      _
    // Predicated region
    $region6: #{tpu_custom_call.1} parent=1 // pred_check
      _
    $region7: #{tpu_custom_call.1} parent=1 // pred_check_branch
      %12 = sbr.rel (0) target = $region9
    $region8: #{tpu_custom_call.1} parent=1 // pred_region
      _
    $region9: #{tpu_custom_call.1} parent=1 // pred_fallthru
      _
    // Predicated region
    $region10: #{tpu_custom_call.1} parent=1 // pred_check
      _
    $region11: #{tpu_custom_call.1} parent=1 // pred_check_branch
      %14 = sbr.rel (0) target = $region13
    $region12: #{tpu_custom_call.1} parent=1 // pred_region
      _
    $region13: #{tpu_custom_call.1} parent=1 // pred_fallthru
      _
    %v16 = vld [vmem:[%s0] sm:$0xff]
    %v17 = vld [vmem:[%s0 + $0x8] sm:$0xff]
    %v18 = vld [vmem:[%s0 + $0x10] sm:$0xff]
    %v19 = vld [vmem:[%s0 + $0x18] sm:$0xff]
    %v20 = vld [vmem:[%s0 + $0x20] sm:$0xff]
    %v21 = vld [vmem:[%s0 + $0x28] sm:$0xff]
    %v22 = vld [vmem:[%s0 + $0x30] sm:$0xff]
    %v23 = vld [vmem:[%s0 + $0x38] sm:$0xff]
    %v24 = vpack.c.bf16 %v17, %v16
    %v25 = vpack.c.bf16 %v19, %v18
    %v26 = vpack.c.bf16 %v21, %v20
    %v27 = vpack.c.bf16 %v23, %v22
    %v28 = vld [vmem:[%s1] sm:$0xf]
    %v29 = vld [vmem:[%s1 + $0x4] sm:$0xf]
    %v30 = vld [vmem:[%s1 + $0x8] sm:$0xf]
    %v31 = vld [vmem:[%s1 + $0xc] sm:$0xf]
    %v32 = vld [vmem:[%s2] sm:$0x1]
    %v34 = vlaneseq
    %v35 = vshrl.u32 %v34, 7
    %v36 = vsub.s32 0, %v35
    %v37 = vrot.slane %v32, %v36
    %v43 = vunpack.c.l.b16 %v28
    %v44 = vunpack.c.l.b16 %v29
    %v45 = vunpack.c.l.b16 %v30
    %v46 = vunpack.c.l.b16 %v31
    %v47 = vpack.c.b16 %v44, %v43
    %v48 = vpack.c.b16 %v46, %v45
    %vm51 = vcmask 261120
    %v53 = vsel %vm51, %v24, 0
    %v56 = vsel %vm51, %v25, 0
    %v59 = vsel %vm51, %v26, 0
    %v62 = vsel %vm51, %v27, 0
    %64 = vmatprep.subr.bf16.mxu0 0
    %65 = vmatpush1.bf16.msra.mxu0 %v47
    %66 = vmatprep.subr.bf16.mxu0 0
    %67 = vmatpush1.bf16.msra.mxu0 %v48
    %68 = vmatprep.subr.bf16.mxu0 0
    %69 = vmatpush1.bf16.msra.mxu0 0
    %70 = vmatprep.subr.bf16.mxu0 0
    %71 = vmatpush1.bf16.msra.mxu0 0
    %72 = vmatprep.subr.bf16.mxu0 0
    %73 = vmatpush1.bf16.msra.mxu0 0
    %74 = vmatprep.subr.bf16.mxu0 0
    %75 = vmatpush1.bf16.msra.mxu0 0
    %76 = vmatprep.subr.bf16.mxu0 0
    %77 = vmatpush1.bf16.msra.mxu0 0
    %78 = vmatprep.subr.bf16.mxu0 0
    %79 = vmatpush1.bf16.msra.mxu0 0
    %80 = vmatprep.subr.bf16.mxu0 0
    %81 = vmatpush1.bf16.msra.mxu0 0
    %82 = vmatprep.subr.bf16.mxu0 0
    %83 = vmatpush1.bf16.msra.mxu0 0
    %84 = vmatprep.subr.bf16.mxu0 0
    %85 = vmatpush1.bf16.msra.mxu0 0
    %86 = vmatprep.subr.bf16.mxu0 0
    %87 = vmatpush1.bf16.msra.mxu0 0
    %88 = vmatprep.subr.bf16.mxu0 0
    %89 = vmatpush1.bf16.msra.mxu0 0
    %90 = vmatprep.subr.bf16.mxu0 0
    %91 = vmatpush1.bf16.msra.mxu0 0
    %92 = vmatprep.subr.bf16.mxu0 0
    %93 = vmatpush1.bf16.msra.mxu0 0
    %94 = vmatprep.subr.bf16.mxu0 0
    %95 = vmatpush1.bf16.msra.mxu0 0
    %96 = vmatprep.mubr.bf16.mxu0 0
    %97 = vmatmul.mubr.bf16.gmra.mrb[0].mxu0 %v53
    %v98 = vpop.f32.mrb[0].mxu0
    %v99 = vadd.f32 %v37, %v98
    %v100 = vpop.f32.mrb[0].mxu0
    %v101 = vpop.f32.mrb[0].mxu0
    %v102 = vadd.f32 %v37, %v101
    %v103 = vpop.f32.mrb[0].mxu0
    %104 = vmatprep.mubr.bf16.mxu0 0
    %105 = vmatmul.mubr.bf16.gmra.mrb[0].mxu0 %v56
    %v106 = vpop.f32.mrb[0].mxu0
    %v107 = vadd.f32 %v37, %v106
    %v108 = vpop.f32.mrb[0].mxu0
    %v109 = vpop.f32.mrb[0].mxu0
    %v110 = vadd.f32 %v37, %v109
    %v111 = vpop.f32.mrb[0].mxu0
    %112 = vmatprep.mubr.bf16.mxu0 0
    %113 = vmatmul.mubr.bf16.gmra.mrb[0].mxu0 %v59
    %v114 = vpop.f32.mrb[0].mxu0
    %v115 = vadd.f32 %v37, %v114
    %v116 = vpop.f32.mrb[0].mxu0
    %v117 = vpop.f32.mrb[0].mxu0
    %v118 = vadd.f32 %v37, %v117
    %v119 = vpop.f32.mrb[0].mxu0
    %120 = vmatprep.mubr.bf16.mxu0 0
    %121 = vmatmul.mubr.bf16.gmra.mrb[0].mxu0 %v62
    %v122 = vpop.f32.mrb[0].mxu0
    %v123 = vadd.f32 %v37, %v122
    %v124 = vpop.f32.mrb[0].mxu0
    %v125 = vpop.f32.mrb[0].mxu0
    %v126 = vadd.f32 %v37, %v125
    %v127 = vpop.f32.mrb[0].mxu0
    %128 = vdwg.mxu0
    %vm129 = vcmask 130048
    %v130 = vsel %vm129, %v99, -inf
    %131 = vmax.xlane.f32.xlu0 %v130
    %v132 = vpop.xlane.xlu0 %131
    %v133 = vsel %vm129, %v102, -inf
    %134 = vmax.xlane.f32.xlu0 %v133
    %v135 = vpop.xlane.xlu0 %134
    %v136 = vsel %vm129, %v107, -inf
    %137 = vmax.xlane.f32.xlu0 %v136
    %v138 = vpop.xlane.xlu0 %137
    %v139 = vsel %vm129, %v110, -inf
    %140 = vmax.xlane.f32.xlu0 %v139
    %v141 = vpop.xlane.xlu0 %140
    %v142 = vsel %vm129, %v115, -inf
    %143 = vmax.xlane.f32.xlu0 %v142
    %v144 = vpop.xlane.xlu0 %143
    %v145 = vsel %vm129, %v118, -inf
    %146 = vmax.xlane.f32.xlu0 %v145
    %v147 = vpop.xlane.xlu0 %146
    %v148 = vsel %vm129, %v123, -inf
    %149 = vmax.xlane.f32.xlu0 %v148
    %v150 = vpop.xlane.xlu0 %149
    %v151 = vsel %vm129, %v126, -inf
    %152 = vmax.xlane.f32.xlu0 %v151
    %v153 = vpop.xlane.xlu0 %152
    %v154 = vsub.f32 %v99, %v132
    %v155 = vsub.f32 %v102, %v135
    %v156 = vsub.f32 %v107, %v138
    %v157 = vsub.f32 %v110, %v141
    %v158 = vsub.f32 %v115, %v144
    %v159 = vsub.f32 %v118, %v147
    %v160 = vsub.f32 %v123, %v150
    %v161 = vsub.f32 %v126, %v153
    %v162 = vmul.f32 %v154, 1.442695
    %v163 = vpow.pop %v162
    %v164 = vmul.f32 %v155, 1.442695
    %v165 = vpow.pop %v164
    %v166 = vmul.f32 %v156, 1.442695
    %v167 = vpow.pop %v166
    %v168 = vmul.f32 %v157, 1.442695
    %v169 = vpow.pop %v168
    %v170 = vmul.f32 %v158, 1.442695
    %v171 = vpow.pop %v170
    %v172 = vmul.f32 %v159, 1.442695
    %v173 = vpow.pop %v172
    %v174 = vmul.f32 %v160, 1.442695
    %v175 = vpow.pop %v174
    %v176 = vmul.f32 %v161, 1.442695
    %v177 = vpow.pop %v176
    %v178 = vsel %vm129, %v163, 0.0
    %179 = vadd.xlane.f32.xlu0 %v178
    %v180 = vpop.xlane.xlu0 %179
    %v181 = vsel %vm129, %v165, 0.0
    %182 = vadd.xlane.f32.xlu0 %v181
    %v183 = vpop.xlane.xlu0 %182
    %v184 = vsel %vm129, %v167, 0.0
    %185 = vadd.xlane.f32.xlu0 %v184
    %v186 = vpop.xlane.xlu0 %185
    %v187 = vsel %vm129, %v169, 0.0
    %188 = vadd.xlane.f32.xlu0 %v187
    %v189 = vpop.xlane.xlu0 %188
    %v190 = vsel %vm129, %v171, 0.0
    %191 = vadd.xlane.f32.xlu0 %v190
    %v192 = vpop.xlane.xlu0 %191
    %v193 = vsel %vm129, %v173, 0.0
    %194 = vadd.xlane.f32.xlu0 %v193
    %v195 = vpop.xlane.xlu0 %194
    %v196 = vsel %vm129, %v175, 0.0
    %197 = vadd.xlane.f32.xlu0 %v196
    %v198 = vpop.xlane.xlu0 %197
    %v199 = vsel %vm129, %v177, 0.0
    %200 = vadd.xlane.f32.xlu0 %v199
    %v201 = vpop.xlane.xlu0 %200
    %v202 = vlog2.pop %v180
    %v203 = vmul.f32 %v202, 0.6931472
    %v204 = vlog2.pop %v183
    %v205 = vmul.f32 %v204, 0.6931472
    %v206 = vlog2.pop %v186
    %v207 = vmul.f32 %v206, 0.6931472
    %v208 = vlog2.pop %v189
    %v209 = vmul.f32 %v208, 0.6931472
    %v210 = vlog2.pop %v192
    %v211 = vmul.f32 %v210, 0.6931472
    %v212 = vlog2.pop %v195
    %v213 = vmul.f32 %v212, 0.6931472
    %v214 = vlog2.pop %v198
    %v215 = vmul.f32 %v214, 0.6931472
    %v216 = vlog2.pop %v201
    %v217 = vmul.f32 %v216, 0.6931472
    %v218 = vsub.f32 %v154, %v203
    %v219 = vsub.f32 %v155, %v205
    %v220 = vsub.f32 %v156, %v207
    %v221 = vsub.f32 %v157, %v209
    %v222 = vsub.f32 %v158, %v211
    %v223 = vsub.f32 %v159, %v213
    %v224 = vsub.f32 %v160, %v215
    %v225 = vsub.f32 %v161, %v217
    %226 = vst.msk [vmem:[#allocation2] sm:$0xff] %vm129, %v218
    %228 = vrot.lane.b32.xlu0 %v219, 16
    %v229 = vpop.permute.xlu0 %228
    %vm231 = vcmask 261248
    %232 = vst.msk [vmem:[#allocation2] sm:$0xff] %vm231, %v229
    %234 = vrot.lane.b32.xlu0 %v220, 32
    %v235 = vpop.permute.xlu0 %234
    %vm237 = vcmask 392448
    %238 = vst.msk [vmem:[#allocation2] sm:$0xff] %vm237, %v235
    %240 = vrot.lane.b32.xlu0 %v221, 48
    %v241 = vpop.permute.xlu0 %240
    %vm243 = vcmask 523648
    %244 = vst.msk [vmem:[#allocation2] sm:$0xff] %vm243, %v241
    %246 = vrot.lane.b32.xlu0 %v222, 64
    %v247 = vpop.permute.xlu0 %246
    %vm249 = vcmask 654848
    %250 = vst.msk [vmem:[#allocation2] sm:$0xff] %vm249, %v247
    %252 = vrot.lane.b32.xlu0 %v223, 80
    %v253 = vpop.permute.xlu0 %252
    %vm255 = vcmask 786048
    %256 = vst.msk [vmem:[#allocation2] sm:$0xff] %vm255, %v253
    %258 = vrot.lane.b32.xlu0 %v224, 96
    %v259 = vpop.permute.xlu0 %258
    %vm261 = vcmask 917248
    %262 = vst.msk [vmem:[#allocation2] sm:$0xff] %vm261, %v259
    %264 = vrot.lane.b32.xlu0 %v225, 112
    %v265 = vpop.permute.xlu0 %264
    %vm267 = vcmask 1048448
    %268 = vst.msk [vmem:[#allocation2] sm:$0xff] %vm267, %v265
    // Predicated region
    $region14: #{tpu_custom_call.1} parent=1 // pred_check
      _
    $region15: #{tpu_custom_call.1} parent=1 // pred_check_branch
      %270 = sbr.rel (0) target = $region17
    $region16: #{tpu_custom_call.1} parent=1 // pred_region
      %s272 = ssub.s32 128, 128
      %273 = vsyncadd [#allocation3], %s272
      %s275 = sshll.u32 [#allocation2], 4
      %s276 = int_to_ptr.vmem [resolvable:$true] %s275
      %278 = dma.vmem_to_hbm [thread:$0]  %s276, 128, %s3, [#allocation3]
    $region17: #{tpu_custom_call.1} parent=1 // pred_fallthru
      _
    // Predicated region
    $region18: #{tpu_custom_call.1} parent=1 // pred_check
      _
    $region19: #{tpu_custom_call.1} parent=1 // pred_check_branch
      %280 = sbr.rel (0) target = $region21
    $region20: #{tpu_custom_call.1} parent=1 // pred_region
      %281 = dma.done [#allocation3], 128
    $region21: #{tpu_custom_call.1} parent=1 // pred_fallthru
      _
    %282 = vsyncpa [#allocation3], 1

</llo_original>
